<compile_context>
chip_gen: v5e
topology: v5e:2x2
jax: 0.10.0
libtpu: 0.0.40
codegen_flags: <defaults>
</compile_context>

<pallas_src>
import jax
import jax.numpy as jnp
from jax.experimental import pallas as pl
from jax.experimental.pallas import tpu as pltpu


def _round_up(x, m):
    return ((x + m - 1) // m) * m


def _conv1x1_kernel(x_ref, w_ref, b_ref, o_ref):
    # x_ref: [TILE_P, Cin]      (bf16, pipelined over the P grid axis)
    # w_ref: [Cin, Cout_pad]    (bf16, grid-invariant -> resident in VMEM)
    # b_ref: [1, Cout_pad]      (f32,  grid-invariant)
    # o_ref: [TILE_P, Cout_pad] (f32)
    acc = jnp.dot(x_ref[...], w_ref[...], preferred_element_type=jnp.float32)
    o_ref[...] = (acc + b_ref[...]).astype(o_ref.dtype)


def conv2d_1x1(x_nchw, weight, bias, *, tile_p=512):
    """1x1 conv, stride 1.  x_nchw: [N, Cin, H, W]; weight: [Cout, Cin, 1, 1];
    bias: [Cout].  Returns [N, Cout, H, W] in x's dtype."""
    n, cin, h, w = x_nchw.shape
    cout = weight.shape[0]
    out_dtype = x_nchw.dtype

    # ---- wrapper-side layout glue -------------------------------------
    p = n * h * w
    if h == 1 and w == 1:
        x_flat = x_nchw.reshape(p, cin)          # no transpose needed
    else:
        x_flat = jnp.transpose(x_nchw, (0, 2, 3, 1)).reshape(p, cin)

    # bf16 operands for the MXU; bias stays f32 and is added post-dot.
    x_flat = x_flat.astype(jnp.bfloat16)
    w_mat = weight.reshape(cout, cin).T.astype(jnp.bfloat16)   # [Cin, Cout]
    b_mat = bias.astype(jnp.float32).reshape(1, cout)

    # Lane-dense output: pad Cout to a multiple of 128 (1056 -> 1152).
    cout_pad = _round_up(cout, 128)
    if cout_pad != cout:
        w_mat = jnp.pad(w_mat, ((0, 0), (0, cout_pad - cout)))
        b_mat = jnp.pad(b_mat, ((0, 0), (0, cout_pad - cout)))

    # Tile the pixel axis (multiple of 8, capped at tile_p) and pad P so the
    # block divides evenly.
    tp = min(tile_p, _round_up(p, 8))
    p_pad = _round_up(p, tp)
    if p_pad != p:
        x_flat = jnp.pad(x_flat, ((0, p_pad - p), (0, 0)))

    out_flat = pl.pallas_call(
        _conv1x1_kernel,
        out_shape=jax.ShapeDtypeStruct((p_pad, cout_pad), out_dtype),
        grid=(p_pad // tp,),
        in_specs=[
            pl.BlockSpec((tp, cin), lambda i: (i, 0)),
            pl.BlockSpec((cin, cout_pad), lambda i: (0, 0)),   # resident
            pl.BlockSpec((1, cout_pad), lambda i: (0, 0)),     # resident
        ],
        out_specs=pl.BlockSpec((tp, cout_pad), lambda i: (i, 0)),
        compiler_params=pltpu.CompilerParams(
            dimension_semantics=("parallel",)),
    )(x_flat, w_mat, b_mat)

    out_flat = out_flat[:p, :cout]

    # Back to NCHW.
    if h == 1 and w == 1:
        return out_flat.reshape(n, cout, 1, 1)
    return jnp.transpose(out_flat.reshape(n, h, w, cout), (0, 3, 1, 2))


def _conv2d_1x1_ref(x, weight, bias):
    """Plain-JAX reference using the same bf16-rounded operands (f32 math)."""
    n, cin, h, w = x.shape
    cout = weight.shape[0]
    xf = jnp.transpose(x, (0, 2, 3, 1)).reshape(-1, cin)
    xf = xf.astype(jnp.bfloat16).astype(jnp.float32)
    wm = weight.reshape(cout, cin).astype(jnp.bfloat16).astype(jnp.float32)
    out = xf @ wm.T + bias.astype(jnp.float32)
    return jnp.transpose(out.reshape(n, h, w, cout), (0, 3, 1, 2))


if __name__ == "__main__":
    key = jax.random.PRNGKey(0)
    kx, kw, kb, kx2 = jax.random.split(key, 4)

    # Shapes implied by the module's forward: x361 is [1, 44, 1, 1].
    N, CIN, H, W = 1, 44, 1, 1
    COUT = 1056

    x = jax.random.normal(kx, (N, CIN, H, W), dtype=jnp.float32)
    weight = jax.random.normal(kw, (COUT, CIN, 1, 1), dtype=jnp.float32) * 0.05
    bias = jax.random.normal(kb, (COUT,), dtype=jnp.float32) * 0.05

    out = conv2d_1x1(x, weight, bias)
    jax.block_until_ready(out)
    ref = _conv2d_1x1_ref(x, weight, bias)
    assert out.shape == (N, COUT, H, W)
    assert jnp.allclose(out, ref, atol=2e-3, rtol=2e-3)

    # Second check with H, W > 1 to exercise the transpose/reshape and
    # P-tiling path (correctness concern from review).
    x2 = jax.random.normal(kx2, (2, CIN, 7, 5), dtype=jnp.float32)
    out2 = conv2d_1x1(x2, weight, bias)
    jax.block_until_ready(out2)
    ref2 = _conv2d_1x1_ref(x2, weight, bias)
    assert out2.shape == (2, COUT, 7, 5)
    assert jnp.allclose(out2, ref2, atol=2e-3, rtol=2e-3)

    print("KERNEL_OK")
</pallas_src>

<mosaic_0001>
module attributes {stable_mosaic.version = 11 : i64} {
  func.func @_conv1x1_kernel(%arg0: i32, %arg1: memref<8x44xbf16, #tpu.memory_space<vmem>>, %arg2: memref<44x1152xbf16, #tpu.memory_space<vmem>>, %arg3: memref<1x1152xf32, #tpu.memory_space<vmem>>, %arg4: memref<8x1152xf32, #tpu.memory_space<vmem>>) attributes {dimension_semantics = [#tpu.dimension_semantics<parallel>], iteration_bounds = array<i64: 1>, scalar_prefetch = 0 : i64, scratch_operands = 0 : i64, tpu.core_type = #tpu.core_type<tc>, window_params = [{transform_indices = @transform_0, window_bounds = array<i64: 8, 44>}, {pipeline_mode = #tpu.pipeline_mode<synchronous>, transform_indices = @transform_1, window_bounds = array<i64: 44, 1152>}, {pipeline_mode = #tpu.pipeline_mode<synchronous>, transform_indices = @transform_2, window_bounds = array<i64: 1, 1152>}, {transform_indices = @transform_3, window_bounds = array<i64: 8, 1152>}]} {
    %c0 = arith.constant 0 : index
    %c0_0 = arith.constant 0 : index
    %0 = vector.load %arg1[%c0, %c0_0] : memref<8x44xbf16, #tpu.memory_space<vmem>>, vector<8x44xbf16>
    %c0_1 = arith.constant 0 : index
    %c0_2 = arith.constant 0 : index
    %1 = vector.load %arg2[%c0_1, %c0_2] : memref<44x1152xbf16, #tpu.memory_space<vmem>>, vector<44x1152xbf16>
    %cst = arith.constant dense<0.000000e+00> : vector<8x1152xf32>
    %2 = tpu.matmul %0, %1, %cst {dimension_numbers = #tpu.dot_dimension_numbers<[1], [0], [0], [1], [0, 0, 1, 1], [], []>} : vector<8x44xbf16>, vector<44x1152xbf16>, vector<8x1152xf32> -> vector<8x1152xf32>
    %c0_3 = arith.constant 0 : index
    %c0_4 = arith.constant 0 : index
    %3 = vector.load %arg3[%c0_3, %c0_4] : memref<1x1152xf32, #tpu.memory_space<vmem>>, vector<1x1152xf32>
    %4 = vector.broadcast %3 : vector<1x1152xf32> to vector<8x1152xf32>
    %5 = arith.addf %2, %4 : vector<8x1152xf32>
    %c0_5 = arith.constant 0 : index
    %c0_6 = arith.constant 0 : index
    %6 = vector.load %arg4[%c0_5, %c0_6] : memref<8x1152xf32, #tpu.memory_space<vmem>>, vector<8x1152xf32>
    tpu.vector_store %arg4[%c0_5, %c0_6], %5 {strides = array<i32>} : memref<8x1152xf32, #tpu.memory_space<vmem>>, vector<8x1152xf32>,
    return
  }
  func.func @transform_0(%arg0: i32) -> (i32, i32) {
    %c0_i32 = arith.constant 0 : i32
    %c0_i32_0 = arith.constant 0 : i32
    return %arg0, %c0_i32 : i32, i32
  }
  func.func @transform_1(%arg0: i32) -> (i32, i32) {
    %c0_i32 = arith.constant 0 : i32
    %c0_i32_0 = arith.constant 0 : i32
    %c0_i32_1 = arith.constant 0 : i32
    return %c0_i32, %c0_i32_0 : i32, i32
  }
  func.func @transform_2(%arg0: i32) -> (i32, i32) {
    %c0_i32 = arith.constant 0 : i32
    %c0_i32_0 = arith.constant 0 : i32
    %c0_i32_1 = arith.constant 0 : i32
    return %c0_i32, %c0_i32_0 : i32, i32
  }
  func.func @transform_3(%arg0: i32) -> (i32, i32) {
    %c0_i32 = arith.constant 0 : i32
    %c0_i32_0 = arith.constant 0 : i32
    return %arg0, %c0_i32 : i32, i32
  }
}

</mosaic_0001>

<llo_original>
// kernel: tpu_custom_call.1
$region0: #{tpu_custom_call.1}
  #allocation0 [shape = 'u32[]', space=smem, size = 0x4, offset = 0x4, fixed_abs, tag = 'smem constant byte address 0x4 - core index']
  #allocation1 [shape = 'u32[72,128]{1,0:T(1,128)}', space=vmem, size = 0x9000, scoped, tag = 'internal scratch']
  %s0 = inlined_call_operand.hbm [shape: bf16[8,44], index: 0, kind: input, shape index: {}]
  %s1 = inlined_call_operand.hbm [shape: bf16[44,1152], index: 1, kind: input, shape index: {}]
  %s2 = inlined_call_operand.hbm [shape: f32[1,1152], index: 2, kind: input, shape index: {}]
  %s3 = inlined_call_operand.hbm [shape: f32[8,1152], index: 3, kind: output, shape index: {}]
  %s4 = sld [smem:[#allocation0]]
  $region34: #{tpu_custom_call.1} parent=0
    _
  %s6 = ssub.s32 1, %s4
  %s7 = scalar_select 0, %s6, %s4
  $region1: #{tpu_custom_call.1} parent=0
    #allocation2 [shape = 'u8[2048]{0}', space=vmem, size = 0x800, scoped, tag = 'input window, operand 0, single buffered']
    #allocation3 [shape = 's32[1]{0}', space=sflag, size = 0x4, scoped, tag = 'scoped memory for tpu_custom_call.1']
    #allocation4 [shape = 's32[1]{0}', space=sflag, size = 0x4, scoped, tag = 'scoped memory for tpu_custom_call.1']
    #allocation5 [shape = 'u8[110592]{0}', space=vmem, size = 0x1b000, scoped, tag = 'input window, operand 1, single buffered']
    #allocation6 [shape = 's32[1]{0}', space=sflag, size = 0x4, scoped, tag = 'scoped memory for tpu_custom_call.1']
    #allocation7 [shape = 'u8[4608]{0}', space=vmem, size = 0x1400, scoped, tag = 'input window, operand 2, single buffered']
    #allocation8 [shape = 'u8[36864]{0}', space=vmem, size = 0x9000, scoped, tag = 'output window, operand 0, single buffered']
    %8 = vsyncpa [#allocation3], 0
    %9 = vsyncpa [#allocation6], 0
    %10 = vsyncpa [#allocation4], 0
    // Predicated region
    $region2: #{tpu_custom_call.1} parent=1 // pred_check
      _
    $region3: #{tpu_custom_call.1} parent=1 // pred_check_branch
      %12 = sbr.rel (0) target = $region5
    $region4: #{tpu_custom_call.1} parent=1 // pred_region
      %14 = vsyncadd [#allocation3], 0
      %s16 = sshll.u32 %s0, 4
      %s17 = int_to_ptr.hbm [resolvable:$true] %s16
      %s18 = sshll.u32 [#allocation2], 4
      %s19 = int_to_ptr.vmem [resolvable:$true] %s18
      %21 = dma.hbm_to_vmem [thread:$0]  %s17, 64, %s19, [#allocation3]
    $region5: #{tpu_custom_call.1} parent=1 // pred_fallthru
      _
    // Predicated region
    $region6: #{tpu_custom_call.1} parent=1 // pred_check
      _
    $region7: #{tpu_custom_call.1} parent=1 // pred_check_branch
      %23 = sbr.rel (0) target = $region9
    $region8: #{tpu_custom_call.1} parent=1 // pred_region
      %25 = vsyncadd [#allocation6], 0
      %s26 = sshll.u32 %s1, 4
      %s27 = int_to_ptr.hbm [resolvable:$true] %s26
      %s28 = sshll.u32 [#allocation5], 4
      %s29 = int_to_ptr.vmem [resolvable:$true] %s28
      %34 = dma.hbm_to_vmem [thread:$0]  %s27, 3456, %s29, [#allocation6], 576, 576, 36
    $region9: #{tpu_custom_call.1} parent=1 // pred_fallthru
      _
    // Predicated region
    $region10: #{tpu_custom_call.1} parent=1 // pred_check
      _
    $region11: #{tpu_custom_call.1} parent=1 // pred_check_branch
      %36 = sbr.rel (0) target = $region13
    $region12: #{tpu_custom_call.1} parent=1 // pred_region
      %38 = vsyncadd [#allocation6], 0
      %s40 = sshll.u32 %s2, 4
      %s41 = int_to_ptr.hbm [resolvable:$true] %s40
      %s42 = sshll.u32 [#allocation7], 4
      %s43 = int_to_ptr.vmem [resolvable:$true] %s42
      %45 = dma.hbm_to_vmem [thread:$0]  %s41, 144, %s43, [#allocation6]
    $region13: #{tpu_custom_call.1} parent=1 // pred_fallthru
      _
    // Predicated region
    $region14: #{tpu_custom_call.1} parent=1 // pred_check
      _
    $region15: #{tpu_custom_call.1} parent=1 // pred_check_branch
      %47 = sbr.rel (0) target = $region17
    $region16: #{tpu_custom_call.1} parent=1 // pred_region
      %49 = dma.done [#allocation3], 64
    $region17: #{tpu_custom_call.1} parent=1 // pred_fallthru
      _
    // Predicated region
    $region18: #{tpu_custom_call.1} parent=1 // pred_check
      _
    $region19: #{tpu_custom_call.1} parent=1 // pred_check_branch
      %51 = sbr.rel (0) target = $region21
    $region20: #{tpu_custom_call.1} parent=1 // pred_region
      %53 = dma.done [#allocation6], 3456
    $region21: #{tpu_custom_call.1} parent=1 // pred_fallthru
      _
    // Predicated region
    $region22: #{tpu_custom_call.1} parent=1 // pred_check
      _
    $region23: #{tpu_custom_call.1} parent=1 // pred_check_branch
      %55 = sbr.rel (0) target = $region25
    $region24: #{tpu_custom_call.1} parent=1 // pred_region
      %57 = dma.done [#allocation6], 144
    $region25: #{tpu_custom_call.1} parent=1 // pred_fallthru
      _
    %v59 = vld [vmem:[#allocation2] sm:$0xf]
    %v60 = vld [vmem:[#allocation5] sm:$0xff]
    %v61 = vld [vmem:[#allocation5 + $0x8] sm:$0xff]
    %v62 = vld [vmem:[#allocation5 + $0x10] sm:$0xff]
    %v63 = vld [vmem:[#allocation5 + $0x18] sm:$0xff]
    %v64 = vld [vmem:[#allocation5 + $0x20] sm:$0xf]
    %v65 = vld [vmem:[#allocation5 + $0x24] sm:$0xff]
    %v66 = vld [vmem:[#allocation5 + $0x2c] sm:$0xff]
    %v67 = vld [vmem:[#allocation5 + $0x34] sm:$0xff]
    %v68 = vld [vmem:[#allocation5 + $0x3c] sm:$0xff]
    %v69 = vld [vmem:[#allocation5 + $0x44] sm:$0xf]
    %v70 = vld [vmem:[#allocation5 + $0x48] sm:$0xff]
    %v71 = vld [vmem:[#allocation5 + $0x50] sm:$0xff]
    %v72 = vld [vmem:[#allocation5 + $0x58] sm:$0xff]
    %v73 = vld [vmem:[#allocation5 + $0x60] sm:$0xff]
    %v74 = vld [vmem:[#allocation5 + $0x68] sm:$0xf]
    %v75 = vld [vmem:[#allocation5 + $0x6c] sm:$0xff]
    %v76 = vld [vmem:[#allocation5 + $0x74] sm:$0xff]
    %v77 = vld [vmem:[#allocation5 + $0x7c] sm:$0xff]
    %v78 = vld [vmem:[#allocation5 + $0x84] sm:$0xff]
    %v79 = vld [vmem:[#allocation5 + $0x8c] sm:$0xf]
    %v80 = vld [vmem:[#allocation5 + $0x90] sm:$0xff]
    %v81 = vld [vmem:[#allocation5 + $0x98] sm:$0xff]
    %v82 = vld [vmem:[#allocation5 + $0xa0] sm:$0xff]
    %v83 = vld [vmem:[#allocation5 + $0xa8] sm:$0xff]
    %v84 = vld [vmem:[#allocation5 + $0xb0] sm:$0xf]
    %v85 = vld [vmem:[#allocation5 + $0xb4] sm:$0x33]
    %v86 = vld [vmem:[#allocation5 + $0xbc] sm:$0x33]
    %v87 = vld [vmem:[#allocation5 + $0xc4] sm:$0x33]
    %v88 = vld [vmem:[#allocation5 + $0xcc] sm:$0x33]
    %v89 = vld [vmem:[#allocation5 + $0xd4] sm:$0x3]
    %v90 = vld [vmem:[#allocation7] sm:$0xff]
    %v91 = vld [vmem:[#allocation7 + $0x8] sm:$0x1]
    %v94 = vperm.slane %v90, 0
    %v95 = vperm.slane %v90, 1
    %v96 = vperm.slane %v90, 2
    %v97 = vperm.slane %v90, 3
    %v98 = vperm.slane %v90, 4
    %v99 = vperm.slane %v90, 5
    %v100 = vperm.slane %v90, 6
    %v101 = vperm.slane %v90, 7
    %v102 = vperm.slane %v91, 0
    %v142 = vunpack.c.l.b16 %v60
    %v143 = vunpack.c.h.b16 %v60
    %v144 = vunpack.c.l.b16 %v61
    %v145 = vunpack.c.h.b16 %v61
    %v146 = vunpack.c.l.b16 %v62
    %v147 = vunpack.c.h.b16 %v62
    %v148 = vunpack.c.l.b16 %v63
    %v149 = vunpack.c.h.b16 %v63
    %v150 = vunpack.c.l.b16 %v64
    %v151 = vunpack.c.l.b16 %v65
    %v152 = vunpack.c.h.b16 %v65
    %v153 = vunpack.c.l.b16 %v66
    %v154 = vunpack.c.h.b16 %v66
    %v155 = vunpack.c.l.b16 %v67
    %v156 = vunpack.c.h.b16 %v67
    %v157 = vunpack.c.l.b16 %v68
    %v158 = vunpack.c.h.b16 %v68
    %v159 = vunpack.c.l.b16 %v69
    %v160 = vunpack.c.l.b16 %v70
    %v161 = vunpack.c.h.b16 %v70
    %v162 = vunpack.c.l.b16 %v71
    %v163 = vunpack.c.h.b16 %v71
    %v164 = vunpack.c.l.b16 %v72
    %v165 = vunpack.c.h.b16 %v72
    %v166 = vunpack.c.l.b16 %v73
    %v167 = vunpack.c.h.b16 %v73
    %v168 = vunpack.c.l.b16 %v74
    %v169 = vunpack.c.l.b16 %v75
    %v170 = vunpack.c.h.b16 %v75
    %v171 = vunpack.c.l.b16 %v76
    %v172 = vunpack.c.h.b16 %v76
    %v173 = vunpack.c.l.b16 %v77
    %v174 = vunpack.c.h.b16 %v77
    %v175 = vunpack.c.l.b16 %v78
    %v176 = vunpack.c.h.b16 %v78
    %v177 = vunpack.c.l.b16 %v79
    %v178 = vunpack.c.l.b16 %v80
    %v179 = vunpack.c.h.b16 %v80
    %v180 = vunpack.c.l.b16 %v81
    %v181 = vunpack.c.h.b16 %v81
    %v182 = vunpack.c.l.b16 %v82
    %v183 = vunpack.c.h.b16 %v82
    %v184 = vunpack.c.l.b16 %v83
    %v185 = vunpack.c.h.b16 %v83
    %v186 = vunpack.c.l.b16 %v84
    %v187 = vunpack.c.l.b16 %v85
    %v188 = vunpack.c.h.b16 %v85
    %v189 = vunpack.c.l.b16 %v86
    %v190 = vunpack.c.h.b16 %v86
    %v191 = vunpack.c.l.b16 %v87
    %v192 = vunpack.c.h.b16 %v87
    %v193 = vunpack.c.l.b16 %v88
    %v194 = vunpack.c.h.b16 %v88
    %v195 = vunpack.c.l.b16 %v89
    %v196 = vpack.c.b16 %v151, %v142
    %v197 = vpack.c.b16 %v152, %v143
    %v198 = vpack.c.b16 %v153, %v144
    %v199 = vpack.c.b16 %v154, %v145
    %v200 = vpack.c.b16 %v155, %v146
    %v201 = vpack.c.b16 %v156, %v147
    %v202 = vpack.c.b16 %v157, %v148
    %v203 = vpack.c.b16 %v158, %v149
    %v204 = vpack.c.b16 %v159, %v150
    %v205 = vpack.c.b16 %v169, %v160
    %v206 = vpack.c.b16 %v170, %v161
    %v207 = vpack.c.b16 %v171, %v162
    %v208 = vpack.c.b16 %v172, %v163
    %v209 = vpack.c.b16 %v173, %v164
    %v210 = vpack.c.b16 %v174, %v165
    %v211 = vpack.c.b16 %v175, %v166
    %v212 = vpack.c.b16 %v176, %v167
    %v213 = vpack.c.b16 %v177, %v168
    %v214 = vpack.c.b16 %v187, %v178
    %v215 = vpack.c.b16 %v188, %v179
    %v216 = vpack.c.b16 %v189, %v180
    %v217 = vpack.c.b16 %v190, %v181
    %v218 = vpack.c.b16 %v191, %v182
    %v219 = vpack.c.b16 %v192, %v183
    %v220 = vpack.c.b16 %v193, %v184
    %v221 = vpack.c.b16 %v194, %v185
    %v222 = vpack.c.b16 %v195, %v186
    %vm241 = vcmask 359424
    %v243 = vsel %vm241, %v59, 0
    %vm245 = vcmask 1045504
    %v247 = vsel %vm245, %v214, 0
    %v250 = vsel %vm245, %v215, 0
    %v253 = vsel %vm245, %v216, 0
    %v256 = vsel %vm245, %v217, 0
    %v259 = vsel %vm245, %v218, 0
    %v262 = vsel %vm245, %v219, 0
    %v265 = vsel %vm245, %v220, 0
    %v268 = vsel %vm245, %v221, 0
    %v271 = vsel %vm245, %v222, 0
    %273 = vmatpush.bf16.msra.mxu0 0
    %274 = vmatpush.bf16.msra.mxu0 0
    %275 = vmatpush.bf16.msra.mxu0 0
    %276 = vmatpush.bf16.msra.mxu0 0
    %277 = vmatpush.bf16.msra.mxu0 0
    %278 = vmatpush.bf16.msra.mxu0 %v247
    %279 = vmatpush.bf16.msra.mxu0 %v205
    %280 = vmatpush.bf16.msra.mxu0 %v196
    %281 = vmatmul.bf16.gmra.mxu0 %v243
    %v282 = vpop.f32.mrf.mxu0
    %v283 = vadd.f32 %v94, %v282
    %v284 = vpop.f32.mrf.mxu0
    %285 = vdwg.mxu0
    %286 = vmatpush.bf16.msra.mxu0 0
    %287 = vmatpush.bf16.msra.mxu0 0
    %288 = vmatpush.bf16.msra.mxu0 0
    %289 = vmatpush.bf16.msra.mxu0 0
    %290 = vmatpush.bf16.msra.mxu0 0
    %291 = vmatpush.bf16.msra.mxu0 %v250
    %292 = vmatpush.bf16.msra.mxu0 %v206
    %293 = vmatpush.bf16.msra.mxu0 %v197
    %294 = vmatmul.bf16.gmra.mxu0 %v243
    %v295 = vpop.f32.mrf.mxu0
    %v296 = vadd.f32 %v95, %v295
    %v297 = vpop.f32.mrf.mxu0
    %298 = vdwg.mxu0
    %299 = vmatpush.bf16.msra.mxu0 0
    %300 = vmatpush.bf16.msra.mxu0 0
    %301 = vmatpush.bf16.msra.mxu0 0
    %302 = vmatpush.bf16.msra.mxu0 0
    %303 = vmatpush.bf16.msra.mxu0 0
    %304 = vmatpush.bf16.msra.mxu0 %v253
    %305 = vmatpush.bf16.msra.mxu0 %v207
    %306 = vmatpush.bf16.msra.mxu0 %v198
    %307 = vmatmul.bf16.gmra.mxu0 %v243
    %v308 = vpop.f32.mrf.mxu0
    %v309 = vadd.f32 %v96, %v308
    %v310 = vpop.f32.mrf.mxu0
    %311 = vdwg.mxu0
    %312 = vmatpush.bf16.msra.mxu0 0
    %313 = vmatpush.bf16.msra.mxu0 0
    %314 = vmatpush.bf16.msra.mxu0 0
    %315 = vmatpush.bf16.msra.mxu0 0
    %316 = vmatpush.bf16.msra.mxu0 0
    %317 = vmatpush.bf16.msra.mxu0 %v256
    %318 = vmatpush.bf16.msra.mxu0 %v208
    %319 = vmatpush.bf16.msra.mxu0 %v199
    %320 = vmatmul.bf16.gmra.mxu0 %v243
    %v321 = vpop.f32.mrf.mxu0
    %v322 = vadd.f32 %v97, %v321
    %v323 = vpop.f32.mrf.mxu0
    %324 = vdwg.mxu0
    %325 = vmatpush.bf16.msra.mxu0 0
    %326 = vmatpush.bf16.msra.mxu0 0
    %327 = vmatpush.bf16.msra.mxu0 0
    %328 = vmatpush.bf16.msra.mxu0 0
    %329 = vmatpush.bf16.msra.mxu0 0
    %330 = vmatpush.bf16.msra.mxu0 %v259
    %331 = vmatpush.bf16.msra.mxu0 %v209
    %332 = vmatpush.bf16.msra.mxu0 %v200
    %333 = vmatmul.bf16.gmra.mxu0 %v243
    %v334 = vpop.f32.mrf.mxu0
    %v335 = vadd.f32 %v98, %v334
    %v336 = vpop.f32.mrf.mxu0
    %337 = vdwg.mxu0
    %338 = vmatpush.bf16.msra.mxu0 0
    %339 = vmatpush.bf16.msra.mxu0 0
    %340 = vmatpush.bf16.msra.mxu0 0
    %341 = vmatpush.bf16.msra.mxu0 0
    %342 = vmatpush.bf16.msra.mxu0 0
    %343 = vmatpush.bf16.msra.mxu0 %v262
    %344 = vmatpush.bf16.msra.mxu0 %v210
    %345 = vmatpush.bf16.msra.mxu0 %v201
    %346 = vmatmul.bf16.gmra.mxu0 %v243
    %v347 = vpop.f32.mrf.mxu0
    %v348 = vadd.f32 %v99, %v347
    %v349 = vpop.f32.mrf.mxu0
    %350 = vdwg.mxu0
    %351 = vmatpush.bf16.msra.mxu0 0
    %352 = vmatpush.bf16.msra.mxu0 0
    %353 = vmatpush.bf16.msra.mxu0 0
    %354 = vmatpush.bf16.msra.mxu0 0
    %355 = vmatpush.bf16.msra.mxu0 0
    %356 = vmatpush.bf16.msra.mxu0 %v265
    %357 = vmatpush.bf16.msra.mxu0 %v211
    %358 = vmatpush.bf16.msra.mxu0 %v202
    %359 = vmatmul.bf16.gmra.mxu0 %v243
    %v360 = vpop.f32.mrf.mxu0
    %v361 = vadd.f32 %v100, %v360
    %v362 = vpop.f32.mrf.mxu0
    %363 = vdwg.mxu0
    %364 = vmatpush.bf16.msra.mxu0 0
    %365 = vmatpush.bf16.msra.mxu0 0
    %366 = vmatpush.bf16.msra.mxu0 0
    %367 = vmatpush.bf16.msra.mxu0 0
    %368 = vmatpush.bf16.msra.mxu0 0
    %369 = vmatpush.bf16.msra.mxu0 %v268
    %370 = vmatpush.bf16.msra.mxu0 %v212
    %371 = vmatpush.bf16.msra.mxu0 %v203
    %372 = vmatmul.bf16.gmra.mxu0 %v243
    %v373 = vpop.f32.mrf.mxu0
    %v374 = vadd.f32 %v101, %v373
    %v375 = vpop.f32.mrf.mxu0
    %376 = vdwg.mxu0
    %377 = vmatpush.bf16.msra.mxu0 0
    %378 = vmatpush.bf16.msra.mxu0 0
    %379 = vmatpush.bf16.msra.mxu0 0
    %380 = vmatpush.bf16.msra.mxu0 0
    %381 = vmatpush.bf16.msra.mxu0 0
    %382 = vmatpush.bf16.msra.mxu0 %v271
    %383 = vmatpush.bf16.msra.mxu0 %v213
    %384 = vmatpush.bf16.msra.mxu0 %v204
    %385 = vmatmul.bf16.gmra.mxu0 %v243
    %v386 = vpop.f32.mrf.mxu0
    %v387 = vadd.f32 %v102, %v386
    %v388 = vpop.f32.mrf.mxu0
    %389 = vdwg.mxu0
    %390 = vst [vmem:[#allocation8] sm:$0xff] %v283
    %391 = vst [vmem:[#allocation8 + $0x8] sm:$0xff] %v296
    %392 = vst [vmem:[#allocation8 + $0x10] sm:$0xff] %v309
    %393 = vst [vmem:[#allocation8 + $0x18] sm:$0xff] %v322
    %394 = vst [vmem:[#allocation8 + $0x20] sm:$0xff] %v335
    %395 = vst [vmem:[#allocation8 + $0x28] sm:$0xff] %v348
    %396 = vst [vmem:[#allocation8 + $0x30] sm:$0xff] %v361
    %397 = vst [vmem:[#allocation8 + $0x38] sm:$0xff] %v374
    %398 = vst [vmem:[#allocation8 + $0x40] sm:$0xff] %v387
    // Predicated region
    $region26: #{tpu_custom_call.1} parent=1 // pred_check
      _
    $region27: #{tpu_custom_call.1} parent=1 // pred_check_branch
      %400 = sbr.rel (0) target = $region29
    $region28: #{tpu_custom_call.1} parent=1 // pred_region
      %402 = vsyncadd [#allocation4], 0
      %s404 = sshll.u32 [#allocation8], 4
      %s405 = int_to_ptr.vmem [resolvable:$true] %s404
      %s406 = sshll.u32 %s3, 4
      %s407 = int_to_ptr.hbm [resolvable:$true] %s406
      %409 = dma.vmem_to_hbm [thread:$0]  %s405, 1152, %s407, [#allocation4]
    $region29: #{tpu_custom_call.1} parent=1 // pred_fallthru
      _
    // Predicated region
    $region30: #{tpu_custom_call.1} parent=1 // pred_check
      _
    $region31: #{tpu_custom_call.1} parent=1 // pred_check_branch
      %411 = sbr.rel (0) target = $region33
    $region32: #{tpu_custom_call.1} parent=1 // pred_region
      %413 = dma.done [#allocation4], 1152
    $region33: #{tpu_custom_call.1} parent=1 // pred_fallthru
      _
    %414 = vsyncpa [#allocation3], 1
    %415 = vsyncpa [#allocation6], 1
    %416 = vsyncpa [#allocation4], 1

</llo_original>
